<compile_context>
chip_gen: v7x
topology: tpu7x:2x2x1
jax: 0.10.0
libtpu: 0.0.40
codegen_flags: <defaults>
</compile_context>

<pallas_src>
import functools

import jax
import jax.numpy as jnp
from jax.experimental import pallas as pl
from jax.experimental.pallas import tpu as pltpu


def _round_up(x, m):
    return ((x + m - 1) // m) * m


def graph_classifier_kernel(h_ref, w1_ref, b1_ref, w23_ref, b23_ref, o_ref):
    # Linear(emb -> 2*emb) + ReLU.  bf16 operands, f32 MXU accumulation.
    h1 = jnp.dot(h_ref[...], w1_ref[...], preferred_element_type=jnp.float32)
    h1 = jnp.maximum(h1 + b1_ref[...], 0.0)                     # f32 epilogue (VPU)
    # Fused Linear(2*emb -> C) o Linear(C -> C), lane-padded to 128 outputs.
    out = jnp.dot(h1.astype(jnp.bfloat16), w23_ref[...],
                  preferred_element_type=jnp.float32)
    o_ref[...] = (out + b23_ref[...]).astype(o_ref.dtype)       # (tm, 128)


@functools.partial(jax.jit, static_argnames=("tm", "lane_pad"))
def graph_classifier_forward(h, params, *, tm=256, lane_pad=128):
    """h: [N, emb_dim] float32.  params: dict of transposed weights/biases."""
    N, emb = h.shape
    w1, b1 = params["w1"], params["b1"]          # (emb, 2*emb), (1, 2*emb)
    w2, b2 = params["w2"], params["b2"]          # (2*emb, C),   (1, C)
    w3, b3 = params["w3"], params["b3"]          # (C, C),       (1, C)
    hid = w1.shape[1]
    C = w3.shape[1]

    # --- Fuse the last two linears (exact: no nonlinearity between them). ---
    w23 = jnp.dot(w2, w3, preferred_element_type=jnp.float32)   # (hid, C)
    b23 = jnp.dot(b2, w3, preferred_element_type=jnp.float32) + b3  # (1, C)

    # --- Lane-dense output: pad class dim C -> Cp (multiple of 128). ---
    Cp = _round_up(max(C, lane_pad), 128)
    w23 = jnp.pad(w23, ((0, 0), (0, Cp - C)))                   # zero columns
    b23 = jnp.pad(b23, ((0, 0), (0, Cp - C)))

    # --- Row tiling: tm multiple of 8 (f32 sublanes); pad N up to tile. ---
    tm_eff = min(tm, _round_up(N, 8))
    Np = _round_up(N, tm_eff)
    h_pad = jnp.pad(h, ((0, Np - N), (0, 0)))

    # --- bf16 operands for the MXU (f32 accumulation in-kernel). ---
    h_bf = h_pad.astype(jnp.bfloat16)
    w1_bf = w1.astype(jnp.bfloat16)
    w23_bf = w23.astype(jnp.bfloat16)

    grid = (Np // tm_eff,)
    resident = lambda shape: pl.BlockSpec(shape, lambda i: (0, 0))

    out_full = pl.pallas_call(
        graph_classifier_kernel,
        out_shape=jax.ShapeDtypeStruct((Np, Cp), h.dtype),
        grid_spec=pltpu.PrefetchScalarGridSpec(
            num_scalar_prefetch=0,
            grid=grid,
            in_specs=[
                pl.BlockSpec((tm_eff, emb), lambda i: (i, 0)),  # h tile (bf16)
                resident((emb, hid)),                           # w1   (bf16)
                resident((1, hid)),                             # b1   (f32)
                resident((hid, Cp)),                            # w23  (bf16)
                resident((1, Cp)),                              # b23  (f32)
            ],
            out_specs=pl.BlockSpec((tm_eff, Cp), lambda i: (i, 0)),
        ),
        compiler_params=pltpu.CompilerParams(
            dimension_semantics=("parallel",),   # shards rows across v7x's 2 TCs
            vmem_limit_bytes=64 * 1024 * 1024,   # ample headroom even at tm=1024
        ),
    )(h_bf, w1_bf, b1, w23_bf, b23)

    return out_full[:N, :C]


def init_params(key, emb_dim=128, num_class=2):
    """Deterministic synthetic init. Weights stored transposed: [in, out]."""
    ks = jax.random.split(key, 6)
    hid = 2 * emb_dim

    def lin(kw, kb, fan_in, fan_out):
        # mimic nn.Linear's U(-1/sqrt(fan_in), 1/sqrt(fan_in)) init
        bound = 1.0 / jnp.sqrt(float(fan_in))
        w = jax.random.uniform(kw, (fan_in, fan_out), jnp.float32, -bound, bound)
        b = jax.random.uniform(kb, (1, fan_out), jnp.float32, -bound, bound)
        return w, b

    w1, b1 = lin(ks[0], ks[1], emb_dim, hid)
    w2, b2 = lin(ks[2], ks[3], hid, num_class)
    w3, b3 = lin(ks[4], ks[5], num_class, num_class)
    return {"w1": w1, "b1": b1, "w2": w2, "b2": b2, "w3": w3, "b3": b3}


def reference_forward(h, p):
    h1 = jnp.maximum(h @ p["w1"] + p["b1"], 0.0)
    h2 = h1 @ p["w2"] + p["b2"]
    return h2 @ p["w3"] + p["b3"]


if __name__ == "__main__":
    key = jax.random.PRNGKey(0)
    k_h, k_p = jax.random.split(key)

    N, emb_dim, num_class = 16, 128, 2
    h_semantic = jax.random.normal(k_h, (N, emb_dim), jnp.float32)
    params = init_params(k_p, emb_dim=emb_dim, num_class=num_class)

    out = graph_classifier_forward(h_semantic, params)
    out = jax.block_until_ready(out)

    ref = reference_forward(h_semantic, params)
    assert out.shape == (N, num_class)
    # bf16 MXU operands with f32 accumulation -> loosen tolerance vs f32 ref.
    assert jnp.allclose(out, ref, atol=2e-2, rtol=2e-2), "mismatch vs reference"

    print("KERNEL_OK")
</pallas_src>

<mosaic_0001>
module attributes {stable_mosaic.version = 11 : i64} {
  func.func @graph_classifier_kernel(%arg0: i32, %arg1: memref<16x128xbf16, #tpu.memory_space<vmem>>, %arg2: memref<128x256xbf16, #tpu.memory_space<vmem>>, %arg3: memref<1x256xf32, #tpu.memory_space<vmem>>, %arg4: memref<256x128xbf16, #tpu.memory_space<vmem>>, %arg5: memref<1x128xf32, #tpu.memory_space<vmem>>, %arg6: memref<16x128xf32, #tpu.memory_space<vmem>>) attributes {dimension_semantics = [#tpu.dimension_semantics<parallel>], iteration_bounds = array<i64: 1>, scalar_prefetch = 0 : i64, scratch_operands = 0 : i64, tpu.core_type = #tpu.core_type<tc>, window_params = [{transform_indices = @transform_0, window_bounds = array<i64: 16, 128>}, {pipeline_mode = #tpu.pipeline_mode<synchronous>, transform_indices = @transform_1, window_bounds = array<i64: 128, 256>}, {pipeline_mode = #tpu.pipeline_mode<synchronous>, transform_indices = @transform_2, window_bounds = array<i64: 1, 256>}, {pipeline_mode = #tpu.pipeline_mode<synchronous>, transform_indices = @transform_3, window_bounds = array<i64: 256, 128>}, {pipeline_mode = #tpu.pipeline_mode<synchronous>, transform_indices = @transform_4, window_bounds = array<i64: 1, 128>}, {transform_indices = @transform_5, window_bounds = array<i64: 16, 128>}]} {
    %c0 = arith.constant 0 : index
    %c0_0 = arith.constant 0 : index
    %0 = vector.load %arg1[%c0, %c0_0] : memref<16x128xbf16, #tpu.memory_space<vmem>>, vector<16x128xbf16>
    %c0_1 = arith.constant 0 : index
    %c0_2 = arith.constant 0 : index
    %1 = vector.load %arg2[%c0_1, %c0_2] : memref<128x256xbf16, #tpu.memory_space<vmem>>, vector<128x256xbf16>
    %cst = arith.constant dense<0.000000e+00> : vector<16x256xf32>
    %2 = tpu.matmul %0, %1, %cst {dimension_numbers = #tpu.dot_dimension_numbers<[1], [0], [0], [1], [0, 0, 1, 1], [], []>} : vector<16x128xbf16>, vector<128x256xbf16>, vector<16x256xf32> -> vector<16x256xf32>
    %c0_3 = arith.constant 0 : index
    %c0_4 = arith.constant 0 : index
    %3 = vector.load %arg3[%c0_3, %c0_4] : memref<1x256xf32, #tpu.memory_space<vmem>>, vector<1x256xf32>
    %4 = vector.broadcast %3 : vector<1x256xf32> to vector<16x256xf32>
    %5 = arith.addf %2, %4 : vector<16x256xf32>
    %cst_5 = arith.constant 0.000000e+00 : f32
    %6 = vector.broadcast %cst_5 : f32 to vector<16x256xf32>
    %7 = arith.maximumf %5, %6 : vector<16x256xf32>
    %8 = arith.truncf %7 : vector<16x256xf32> to vector<16x256xbf16>
    %c0_6 = arith.constant 0 : index
    %c0_7 = arith.constant 0 : index
    %9 = vector.load %arg4[%c0_6, %c0_7] : memref<256x128xbf16, #tpu.memory_space<vmem>>, vector<256x128xbf16>
    %cst_8 = arith.constant dense<0.000000e+00> : vector<16x128xf32>
    %10 = tpu.matmul %8, %9, %cst_8 {dimension_numbers = #tpu.dot_dimension_numbers<[1], [0], [0], [1], [0, 0, 1, 1], [], []>} : vector<16x256xbf16>, vector<256x128xbf16>, vector<16x128xf32> -> vector<16x128xf32>
    %c0_9 = arith.constant 0 : index
    %c0_10 = arith.constant 0 : index
    %11 = vector.load %arg5[%c0_9, %c0_10] : memref<1x128xf32, #tpu.memory_space<vmem>>, vector<1x128xf32>
    %12 = vector.broadcast %11 : vector<1x128xf32> to vector<16x128xf32>
    %13 = arith.addf %10, %12 : vector<16x128xf32>
    %c0_11 = arith.constant 0 : index
    %c0_12 = arith.constant 0 : index
    %14 = vector.load %arg6[%c0_11, %c0_12] : memref<16x128xf32, #tpu.memory_space<vmem>>, vector<16x128xf32>
    tpu.vector_store %arg6[%c0_11, %c0_12], %13 {strides = array<i32>} : memref<16x128xf32, #tpu.memory_space<vmem>>, vector<16x128xf32>,
    return
  }
  func.func @transform_0(%arg0: i32) -> (i32, i32) {
    %c0_i32 = arith.constant 0 : i32
    %c0_i32_0 = arith.constant 0 : i32
    return %arg0, %c0_i32 : i32, i32
  }
  func.func @transform_1(%arg0: i32) -> (i32, i32) {
    %c0_i32 = arith.constant 0 : i32
    %c0_i32_0 = arith.constant 0 : i32
    %c0_i32_1 = arith.constant 0 : i32
    return %c0_i32, %c0_i32_0 : i32, i32
  }
  func.func @transform_2(%arg0: i32) -> (i32, i32) {
    %c0_i32 = arith.constant 0 : i32
    %c0_i32_0 = arith.constant 0 : i32
    %c0_i32_1 = arith.constant 0 : i32
    return %c0_i32, %c0_i32_0 : i32, i32
  }
  func.func @transform_3(%arg0: i32) -> (i32, i32) {
    %c0_i32 = arith.constant 0 : i32
    %c0_i32_0 = arith.constant 0 : i32
    %c0_i32_1 = arith.constant 0 : i32
    return %c0_i32, %c0_i32_0 : i32, i32
  }
  func.func @transform_4(%arg0: i32) -> (i32, i32) {
    %c0_i32 = arith.constant 0 : i32
    %c0_i32_0 = arith.constant 0 : i32
    %c0_i32_1 = arith.constant 0 : i32
    return %c0_i32, %c0_i32_0 : i32, i32
  }
  func.func @transform_5(%arg0: i32) -> (i32, i32) {
    %c0_i32 = arith.constant 0 : i32
    %c0_i32_0 = arith.constant 0 : i32
    return %arg0, %c0_i32 : i32, i32
  }
}

</mosaic_0001>

<llo_original>
// kernel: graph_classifier_forward.1
$region0: #{graph_classifier_forward.1}
  #allocation0 [shape = 'u32[]', space=smem, size = 0x4, offset = 0x4, fixed_abs, tag = 'smem constant byte address 0x4 - core index']
  #allocation1 [shape = 'u32[144,128]{1,0:T(1,128)}', space=vmem, size = 0x12000, scoped, tag = 'internal scratch']
  %s0 = inlined_call_operand.hbm [shape: bf16[16,128], index: 0, kind: input, shape index: {}]
  %s1 = inlined_call_operand.hbm [shape: bf16[128,256], index: 1, kind: input, shape index: {}]
  %s2 = inlined_call_operand.hbm [shape: f32[1,256], index: 2, kind: input, shape index: {}]
  %s3 = inlined_call_operand.hbm [shape: bf16[256,128], index: 3, kind: input, shape index: {}]
  %s4 = inlined_call_operand.hbm [shape: f32[1,128], index: 4, kind: input, shape index: {}]
  %s5 = inlined_call_operand.hbm [shape: f32[16,128], index: 5, kind: output, shape index: {}]
  %s6 = sld [smem:[#allocation0]]
  $region50: #{graph_classifier_forward.1} parent=0
    _
  %s8 = ssub.s32 1, %s6
  %s9 = scalar_select 0, %s8, %s6
  $region1: #{graph_classifier_forward.1} parent=0
    #allocation2 [shape = 'u8[4096]{0}', space=vmem, size = 0x1000, scoped, tag = 'input window, operand 0, single buffered']
    #allocation3 [shape = 's32[1]{0}', space=sflag, size = 0x4, scoped, tag = 'scoped memory for graph_classifier_forward.1']
    #allocation4 [shape = 's32[1]{0}', space=sflag, size = 0x4, scoped, tag = 'scoped memory for graph_classifier_forward.1']
    #allocation5 [shape = 'u8[65536]{0}', space=vmem, size = 0x10000, scoped, tag = 'input window, operand 1, single buffered']
    #allocation6 [shape = 's32[1]{0}', space=sflag, size = 0x4, scoped, tag = 'scoped memory for graph_classifier_forward.1']
    #allocation7 [shape = 'u8[1024]{0}', space=vmem, size = 0x400, scoped, tag = 'input window, operand 2, single buffered']
    #allocation8 [shape = 'u8[65536]{0}', space=vmem, size = 0x10000, scoped, tag = 'input window, operand 3, single buffered']
    #allocation9 [shape = 's32[1]{0}', space=sflag, size = 0x4, scoped, tag = 'scoped memory for graph_classifier_forward.1']
    #allocation10 [shape = 'u8[512]{0}', space=vmem, size = 0x400, scoped, tag = 'input window, operand 4, single buffered']
    #allocation11 [shape = 'u8[8192]{0}', space=vmem, size = 0x2000, scoped, tag = 'output window, operand 0, single buffered']
    %10 = vsyncpa [#allocation3], 0
    %11 = vsyncpa [#allocation6], 0
    %12 = vsyncpa [#allocation9], 0
    %13 = vsyncpa [#allocation4], 0
    // Predicated region
    $region2: #{graph_classifier_forward.1} parent=1 // pred_check
      _
    $region3: #{graph_classifier_forward.1} parent=1 // pred_check_branch
      %15 = sbr.rel (0) target = $region5
    $region4: #{graph_classifier_forward.1} parent=1 // pred_region
      %s17 = ssub.s32 128, 128
      %18 = vsyncadd [#allocation3], %s17
      %s19 = sshll.u32 [#allocation2], 4
      %s20 = int_to_ptr.vmem [resolvable:$true] %s19
      %25 = dma.hbm_to_vmem [thread:$0]  %s0, 128, %s20, [#allocation3], 64, 64, 4
    $region5: #{graph_classifier_forward.1} parent=1 // pred_fallthru
      _
    // Predicated region
    $region6: #{graph_classifier_forward.1} parent=1 // pred_check
      _
    $region7: #{graph_classifier_forward.1} parent=1 // pred_check_branch
      %27 = sbr.rel (0) target = $region9
    $region8: #{graph_classifier_forward.1} parent=1 // pred_region
      %s29 = ssub.s32 2048, 2048
      %30 = vsyncadd [#allocation6], %s29
      %s31 = sshll.u32 [#allocation5], 4
      %s32 = int_to_ptr.vmem [resolvable:$true] %s31
      %37 = dma.hbm_to_vmem [thread:$0]  %s1, 2048, %s32, [#allocation6], 128, 128, 8
    $region9: #{graph_classifier_forward.1} parent=1 // pred_fallthru
      _
    // Predicated region
    $region10: #{graph_classifier_forward.1} parent=1 // pred_check
      _
    $region11: #{graph_classifier_forward.1} parent=1 // pred_check_branch
      %39 = sbr.rel (0) target = $region13
    $region12: #{graph_classifier_forward.1} parent=1 // pred_region
      %s41 = ssub.s32 32, 32
      %42 = vsyncadd [#allocation6], %s41
      %s44 = sshll.u32 [#allocation7], 4
      %s45 = int_to_ptr.vmem [resolvable:$true] %s44
      %47 = dma.hbm_to_vmem [thread:$0]  %s2, 32, %s45, [#allocation6]
    $region13: #{graph_classifier_forward.1} parent=1 // pred_fallthru
      _
    // Predicated region
    $region14: #{graph_classifier_forward.1} parent=1 // pred_check
      _
    $region15: #{graph_classifier_forward.1} parent=1 // pred_check_branch
      %49 = sbr.rel (0) target = $region17
    $region16: #{graph_classifier_forward.1} parent=1 // pred_region
      %s51 = ssub.s32 2048, 2048
      %52 = vsyncadd [#allocation9], %s51
      %s53 = sshll.u32 [#allocation8], 4
      %s54 = int_to_ptr.vmem [resolvable:$true] %s53
      %59 = dma.hbm_to_vmem [thread:$0]  %s3, 2048, %s54, [#allocation9], 64, 64, 4
    $region17: #{graph_classifier_forward.1} parent=1 // pred_fallthru
      _
    // Predicated region
    $region18: #{graph_classifier_forward.1} parent=1 // pred_check
      _
    $region19: #{graph_classifier_forward.1} parent=1 // pred_check_branch
      %61 = sbr.rel (0) target = $region21
    $region20: #{graph_classifier_forward.1} parent=1 // pred_region
      %s63 = ssub.s32 16, 16
      %64 = vsyncadd [#allocation9], %s63
      %s66 = sshll.u32 [#allocation10], 4
      %s67 = int_to_ptr.vmem [resolvable:$true] %s66
      %69 = dma.hbm_to_vmem [thread:$0]  %s4, 16, %s67, [#allocation9]
    $region21: #{graph_classifier_forward.1} parent=1 // pred_fallthru
      _
    // Predicated region
    $region22: #{graph_classifier_forward.1} parent=1 // pred_check
      _
    $region23: #{graph_classifier_forward.1} parent=1 // pred_check_branch
      %71 = sbr.rel (0) target = $region25
    $region24: #{graph_classifier_forward.1} parent=1 // pred_region
      %72 = dma.done [#allocation3], 128
    $region25: #{graph_classifier_forward.1} parent=1 // pred_fallthru
      _
    // Predicated region
    $region26: #{graph_classifier_forward.1} parent=1 // pred_check
      _
    $region27: #{graph_classifier_forward.1} parent=1 // pred_check_branch
      %74 = sbr.rel (0) target = $region29
    $region28: #{graph_classifier_forward.1} parent=1 // pred_region
      %75 = dma.done [#allocation6], 2048
    $region29: #{graph_classifier_forward.1} parent=1 // pred_fallthru
      _
    // Predicated region
    $region30: #{graph_classifier_forward.1} parent=1 // pred_check
      _
    $region31: #{graph_classifier_forward.1} parent=1 // pred_check_branch
      %77 = sbr.rel (0) target = $region33
    $region32: #{graph_classifier_forward.1} parent=1 // pred_region
      %78 = dma.done [#allocation6], 32
    $region33: #{graph_classifier_forward.1} parent=1 // pred_fallthru
      _
    // Predicated region
    $region34: #{graph_classifier_forward.1} parent=1 // pred_check
      _
    $region35: #{graph_classifier_forward.1} parent=1 // pred_check_branch
      %80 = sbr.rel (0) target = $region37
    $region36: #{graph_classifier_forward.1} parent=1 // pred_region
      %81 = dma.done [#allocation9], 2048
    $region37: #{graph_classifier_forward.1} parent=1 // pred_fallthru
      _
    // Predicated region
    $region38: #{graph_classifier_forward.1} parent=1 // pred_check
      _
    $region39: #{graph_classifier_forward.1} parent=1 // pred_check_branch
      %83 = sbr.rel (0) target = $region41
    $region40: #{graph_classifier_forward.1} parent=1 // pred_region
      %84 = dma.done [#allocation9], 16
    $region41: #{graph_classifier_forward.1} parent=1 // pred_fallthru
      _
    %v86 = vld [vmem:[#allocation2] sm:$0xf]
    %v87 = vld [vmem:[#allocation2 + $0x4] sm:$0xf]
    %v88 = vld [vmem:[#allocation5] sm:$0xff]
    %v89 = vld [vmem:[#allocation5 + $0x8] sm:$0xff]
    %v90 = vld [vmem:[#allocation5 + $0x10] sm:$0xff]
    %v91 = vld [vmem:[#allocation5 + $0x18] sm:$0xff]
    %v92 = vld [vmem:[#allocation5 + $0x20] sm:$0xff]
    %v93 = vld [vmem:[#allocation5 + $0x28] sm:$0xff]
    %v94 = vld [vmem:[#allocation5 + $0x30] sm:$0xff]
    %v95 = vld [vmem:[#allocation5 + $0x38] sm:$0xff]
    %v96 = vld [vmem:[#allocation5 + $0x40] sm:$0xff]
    %v97 = vld [vmem:[#allocation5 + $0x48] sm:$0xff]
    %v98 = vld [vmem:[#allocation5 + $0x50] sm:$0xff]
    %v99 = vld [vmem:[#allocation5 + $0x58] sm:$0xff]
    %v100 = vld [vmem:[#allocation5 + $0x60] sm:$0xff]
    %v101 = vld [vmem:[#allocation5 + $0x68] sm:$0xff]
    %v102 = vld [vmem:[#allocation5 + $0x70] sm:$0xff]
    %v103 = vld [vmem:[#allocation5 + $0x78] sm:$0xff]
    %v104 = vld [vmem:[#allocation7] sm:$0x3]
    %v106 = vlaneseq
    %v107 = vshrl.u32 %v106, 7
    %v108 = vsub.s32 0, %v107
    %v109 = vrot.slane %v104, %v108
    %v110 = vlaneseq
    %v111 = vshrl.u32 %v110, 7
    %v112 = vsub.s32 1, %v111
    %v113 = vrot.slane %v104, %v112
    %v118 = vunpack.c.l.b16 %v86
    %v119 = vunpack.c.l.b16 %v87
    %v120 = vpack.c.b16 %v119, %v118
    %v138 = vunpack.c.l.b16 %v88
    %v139 = vunpack.c.h.b16 %v88
    %v140 = vunpack.c.l.b16 %v89
    %v141 = vunpack.c.h.b16 %v89
    %v142 = vunpack.c.l.b16 %v90
    %v143 = vunpack.c.h.b16 %v90
    %v144 = vunpack.c.l.b16 %v91
    %v145 = vunpack.c.h.b16 %v91
    %v146 = vunpack.c.l.b16 %v92
    %v147 = vunpack.c.h.b16 %v92
    %v148 = vunpack.c.l.b16 %v93
    %v149 = vunpack.c.h.b16 %v93
    %v150 = vunpack.c.l.b16 %v94
    %v151 = vunpack.c.h.b16 %v94
    %v152 = vunpack.c.l.b16 %v95
    %v153 = vunpack.c.h.b16 %v95
    %v154 = vunpack.c.l.b16 %v96
    %v155 = vunpack.c.h.b16 %v96
    %v156 = vunpack.c.l.b16 %v97
    %v157 = vunpack.c.h.b16 %v97
    %v158 = vunpack.c.l.b16 %v98
    %v159 = vunpack.c.h.b16 %v98
    %v160 = vunpack.c.l.b16 %v99
    %v161 = vunpack.c.h.b16 %v99
    %v162 = vunpack.c.l.b16 %v100
    %v163 = vunpack.c.h.b16 %v100
    %v164 = vunpack.c.l.b16 %v101
    %v165 = vunpack.c.h.b16 %v101
    %v166 = vunpack.c.l.b16 %v102
    %v167 = vunpack.c.h.b16 %v102
    %v168 = vunpack.c.l.b16 %v103
    %v169 = vunpack.c.h.b16 %v103
    %v170 = vpack.c.b16 %v140, %v138
    %v171 = vpack.c.b16 %v141, %v139
    %v172 = vpack.c.b16 %v144, %v142
    %v173 = vpack.c.b16 %v145, %v143
    %v174 = vpack.c.b16 %v148, %v146
    %v175 = vpack.c.b16 %v149, %v147
    %v176 = vpack.c.b16 %v152, %v150
    %v177 = vpack.c.b16 %v153, %v151
    %v178 = vpack.c.b16 %v156, %v154
    %v179 = vpack.c.b16 %v157, %v155
    %v180 = vpack.c.b16 %v160, %v158
    %v181 = vpack.c.b16 %v161, %v159
    %v182 = vpack.c.b16 %v164, %v162
    %v183 = vpack.c.b16 %v165, %v163
    %v184 = vpack.c.b16 %v168, %v166
    %v185 = vpack.c.b16 %v169, %v167
    %202 = vmatprep.subr.bf16.mxu0 %v171
    %203 = vmatpush1.bf16.msra.mxu0 %v170
    %204 = vmatprep.subr.bf16.mxu0 %v173
    %205 = vmatpush1.bf16.msra.mxu0 %v172
    %206 = vmatprep.subr.bf16.mxu0 %v175
    %207 = vmatpush1.bf16.msra.mxu0 %v174
    %208 = vmatprep.subr.bf16.mxu0 %v177
    %209 = vmatpush1.bf16.msra.mxu0 %v176
    %210 = vmatprep.subr.bf16.mxu0 %v179
    %211 = vmatpush1.bf16.msra.mxu0 %v178
    %212 = vmatprep.subr.bf16.mxu0 %v181
    %213 = vmatpush1.bf16.msra.mxu0 %v180
    %214 = vmatprep.subr.bf16.mxu0 %v183
    %215 = vmatpush1.bf16.msra.mxu0 %v182
    %216 = vmatprep.subr.bf16.mxu0 %v185
    %217 = vmatpush1.bf16.msra.mxu0 %v184
    %218 = vmatprep.subr.bf16.mxu0 0
    %219 = vmatpush1.bf16.msra.mxu0 0
    %220 = vmatprep.subr.bf16.mxu0 0
    %221 = vmatpush1.bf16.msra.mxu0 0
    %222 = vmatprep.subr.bf16.mxu0 0
    %223 = vmatpush1.bf16.msra.mxu0 0
    %224 = vmatprep.subr.bf16.mxu0 0
    %225 = vmatpush1.bf16.msra.mxu0 0
    %226 = vmatprep.subr.bf16.mxu0 0
    %227 = vmatpush1.bf16.msra.mxu0 0
    %228 = vmatprep.subr.bf16.mxu0 0
    %229 = vmatpush1.bf16.msra.mxu0 0
    %230 = vmatprep.subr.bf16.mxu0 0
    %231 = vmatpush1.bf16.msra.mxu0 0
    %232 = vmatprep.subr.bf16.mxu0 0
    %233 = vmatpush1.bf16.msra.mxu0 0
    %234 = vmatprep.mubr.bf16.mxu0 0
    %235 = vmatmul.mubr.bf16.gmra.mrb[0].mxu0 %v120
    %v236 = vpop.f32.mrb[0].mxu0
    %v237 = vadd.f32 %v109, %v236
    %v238 = vpop.f32.mrb[0].mxu0
    %v239 = vadd.f32 %v113, %v238
    %v240 = vpop.f32.mrb[0].mxu0
    %v241 = vadd.f32 %v109, %v240
    %v242 = vpop.f32.mrb[0].mxu0
    %v243 = vadd.f32 %v113, %v242
    %244 = vdwg.mxu0
    %v245 = vmax.f32 %v237, 0.0
    %v246 = vmax.f32 %v239, 0.0
    %v247 = vmax.f32 %v241, 0.0
    %v248 = vmax.f32 %v243, 0.0
    %v249 = vpack.c.bf16 %v247, %v245
    %v250 = vpack.c.bf16 %v248, %v246
    %v251 = vld [vmem:[#allocation8] sm:$0xf]
    %v252 = vld [vmem:[#allocation8 + $0x4] sm:$0xf]
    %v253 = vld [vmem:[#allocation8 + $0x8] sm:$0xf]
    %v254 = vld [vmem:[#allocation8 + $0xc] sm:$0xf]
    %v255 = vld [vmem:[#allocation8 + $0x10] sm:$0xf]
    %v256 = vld [vmem:[#allocation8 + $0x14] sm:$0xf]
    %v257 = vld [vmem:[#allocation8 + $0x18] sm:$0xf]
    %v258 = vld [vmem:[#allocation8 + $0x1c] sm:$0xf]
    %v259 = vld [vmem:[#allocation8 + $0x20] sm:$0xf]
    %v260 = vld [vmem:[#allocation8 + $0x24] sm:$0xf]
    %v261 = vld [vmem:[#allocation8 + $0x28] sm:$0xf]
    %v262 = vld [vmem:[#allocation8 + $0x2c] sm:$0xf]
    %v263 = vld [vmem:[#allocation8 + $0x30] sm:$0xf]
    %v264 = vld [vmem:[#allocation8 + $0x34] sm:$0xf]
    %v265 = vld [vmem:[#allocation8 + $0x38] sm:$0xf]
    %v266 = vld [vmem:[#allocation8 + $0x3c] sm:$0xf]
    %v267 = vld [vmem:[#allocation8 + $0x40] sm:$0xf]
    %v268 = vld [vmem:[#allocation8 + $0x44] sm:$0xf]
    %v269 = vld [vmem:[#allocation8 + $0x48] sm:$0xf]
    %v270 = vld [vmem:[#allocation8 + $0x4c] sm:$0xf]
    %v271 = vld [vmem:[#allocation8 + $0x50] sm:$0xf]
    %v272 = vld [vmem:[#allocation8 + $0x54] sm:$0xf]
    %v273 = vld [vmem:[#allocation8 + $0x58] sm:$0xf]
    %v274 = vld [vmem:[#allocation8 + $0x5c] sm:$0xf]
    %v275 = vld [vmem:[#allocation8 + $0x60] sm:$0xf]
    %v276 = vld [vmem:[#allocation8 + $0x64] sm:$0xf]
    %v277 = vld [vmem:[#allocation8 + $0x68] sm:$0xf]
    %v278 = vld [vmem:[#allocation8 + $0x6c] sm:$0xf]
    %v279 = vld [vmem:[#allocation8 + $0x70] sm:$0xf]
    %v280 = vld [vmem:[#allocation8 + $0x74] sm:$0xf]
    %v281 = vld [vmem:[#allocation8 + $0x78] sm:$0xf]
    %v282 = vld [vmem:[#allocation8 + $0x7c] sm:$0xf]
    %v283 = vld [vmem:[#allocation10] sm:$0x1]
    %v285 = vlaneseq
    %v286 = vshrl.u32 %v285, 7
    %v287 = vsub.s32 0, %v286
    %v288 = vrot.slane %v283, %v287
    %v322 = vunpack.c.l.b16 %v251
    %v323 = vunpack.c.l.b16 %v252
    %v324 = vunpack.c.l.b16 %v253
    %v325 = vunpack.c.l.b16 %v254
    %v326 = vunpack.c.l.b16 %v255
    %v327 = vunpack.c.l.b16 %v256
    %v328 = vunpack.c.l.b16 %v257
    %v329 = vunpack.c.l.b16 %v258
    %v330 = vunpack.c.l.b16 %v259
    %v331 = vunpack.c.l.b16 %v260
    %v332 = vunpack.c.l.b16 %v261
    %v333 = vunpack.c.l.b16 %v262
    %v334 = vunpack.c.l.b16 %v263
    %v335 = vunpack.c.l.b16 %v264
    %v336 = vunpack.c.l.b16 %v265
    %v337 = vunpack.c.l.b16 %v266
    %v338 = vunpack.c.l.b16 %v267
    %v339 = vunpack.c.l.b16 %v268
    %v340 = vunpack.c.l.b16 %v269
    %v341 = vunpack.c.l.b16 %v270
    %v342 = vunpack.c.l.b16 %v271
    %v343 = vunpack.c.l.b16 %v272
    %v344 = vunpack.c.l.b16 %v273
    %v345 = vunpack.c.l.b16 %v274
    %v346 = vunpack.c.l.b16 %v275
    %v347 = vunpack.c.l.b16 %v276
    %v348 = vunpack.c.l.b16 %v277
    %v349 = vunpack.c.l.b16 %v278
    %v350 = vunpack.c.l.b16 %v279
    %v351 = vunpack.c.l.b16 %v280
    %v352 = vunpack.c.l.b16 %v281
    %v353 = vunpack.c.l.b16 %v282
    %v354 = vpack.c.b16 %v323, %v322
    %v355 = vpack.c.b16 %v325, %v324
    %v356 = vpack.c.b16 %v327, %v326
    %v357 = vpack.c.b16 %v329, %v328
    %v358 = vpack.c.b16 %v331, %v330
    %v359 = vpack.c.b16 %v333, %v332
    %v360 = vpack.c.b16 %v335, %v334
    %v361 = vpack.c.b16 %v337, %v336
    %v362 = vpack.c.b16 %v339, %v338
    %v363 = vpack.c.b16 %v341, %v340
    %v364 = vpack.c.b16 %v343, %v342
    %v365 = vpack.c.b16 %v345, %v344
    %v366 = vpack.c.b16 %v347, %v346
    %v367 = vpack.c.b16 %v349, %v348
    %v368 = vpack.c.b16 %v351, %v350
    %v369 = vpack.c.b16 %v353, %v352
    %386 = vmatprep.subr.bf16.mxu0 0
    %387 = vmatpush1.bf16.msra.mxu0 %v354
    %388 = vmatprep.subr.bf16.mxu0 0
    %389 = vmatpush1.bf16.msra.mxu0 %v355
    %390 = vmatprep.subr.bf16.mxu0 0
    %391 = vmatpush1.bf16.msra.mxu0 %v356
    %392 = vmatprep.subr.bf16.mxu0 0
    %393 = vmatpush1.bf16.msra.mxu0 %v357
    %394 = vmatprep.subr.bf16.mxu0 0
    %395 = vmatpush1.bf16.msra.mxu0 %v358
    %396 = vmatprep.subr.bf16.mxu0 0
    %397 = vmatpush1.bf16.msra.mxu0 %v359
    %398 = vmatprep.subr.bf16.mxu0 0
    %399 = vmatpush1.bf16.msra.mxu0 %v360
    %400 = vmatprep.subr.bf16.mxu0 0
    %401 = vmatpush1.bf16.msra.mxu0 %v361
    %402 = vmatprep.subr.bf16.mxu0 0
    %403 = vmatpush1.bf16.msra.mxu0 %v362
    %404 = vmatprep.subr.bf16.mxu0 0
    %405 = vmatpush1.bf16.msra.mxu0 %v363
    %406 = vmatprep.subr.bf16.mxu0 0
    %407 = vmatpush1.bf16.msra.mxu0 %v364
    %408 = vmatprep.subr.bf16.mxu0 0
    %409 = vmatpush1.bf16.msra.mxu0 %v365
    %410 = vmatprep.subr.bf16.mxu0 0
    %411 = vmatpush1.bf16.msra.mxu0 %v366
    %412 = vmatprep.subr.bf16.mxu0 0
    %413 = vmatpush1.bf16.msra.mxu0 %v367
    %414 = vmatprep.subr.bf16.mxu0 0
    %415 = vmatpush1.bf16.msra.mxu0 %v368
    %416 = vmatprep.subr.bf16.mxu0 0
    %417 = vmatpush1.bf16.msra.mxu0 %v369
    %418 = vmatprep.mubr.bf16.mxu0 %v250
    %419 = vmatmul.mubr.bf16.gmra.mrb[0].mxu0 %v249
    %v420 = vpop.f32.mrb[0].mxu0
    %v421 = vadd.f32 %v288, %v420
    %v422 = vpop.f32.mrb[0].mxu0
    %v423 = vpop.f32.mrb[0].mxu0
    %v424 = vadd.f32 %v288, %v423
    %v425 = vpop.f32.mrb[0].mxu0
    %426 = vdwg.mxu0
    %427 = vst [vmem:[#allocation11] sm:$0xff] %v421
    %428 = vst [vmem:[#allocation11 + $0x8] sm:$0xff] %v424
    // Predicated region
    $region42: #{graph_classifier_forward.1} parent=1 // pred_check
      _
    $region43: #{graph_classifier_forward.1} parent=1 // pred_check_branch
      %430 = sbr.rel (0) target = $region45
    $region44: #{graph_classifier_forward.1} parent=1 // pred_region
      %s432 = ssub.s32 256, 256
      %433 = vsyncadd [#allocation4], %s432
      %s434 = sshll.u32 [#allocation11], 4
      %s435 = int_to_ptr.vmem [resolvable:$true] %s434
      %440 = dma.vmem_to_hbm [thread:$0]  %s435, 256, %s5, [#allocation4], 128, 128, 8
    $region45: #{graph_classifier_forward.1} parent=1 // pred_fallthru
      _
    // Predicated region
    $region46: #{graph_classifier_forward.1} parent=1 // pred_check
      _
    $region47: #{graph_classifier_forward.1} parent=1 // pred_check_branch
      %442 = sbr.rel (0) target = $region49
    $region48: #{graph_classifier_forward.1} parent=1 // pred_region
      %443 = dma.done [#allocation4], 256
    $region49: #{graph_classifier_forward.1} parent=1 // pred_fallthru
      _
    %444 = vsyncpa [#allocation3], 1
    %445 = vsyncpa [#allocation6], 1
    %446 = vsyncpa [#allocation9], 1
    %447 = vsyncpa [#allocation4], 1

</llo_original>
